<compile_context>
chip_gen: v7x
topology: tpu7x:2x2x1
jax: 0.10.0
libtpu: 0.0.40
codegen_flags: <defaults>
</compile_context>

<pallas_src>
import functools

import jax
import jax.numpy as jnp
import numpy as np
from jax import lax
from jax.experimental import pallas as pl
from jax.experimental.pallas import tpu as pltpu


def _round_up(x, m):
    return ((x + m - 1) // m) * m


def _num_tensorcores():
    """Best-effort TensorCore-per-chip count (2 on v7x, 1 on v5e/v6e)."""
    try:
        info = pltpu.get_tpu_info()
        for name in ("num_cores", "tensorcore_count", "num_tensorcores",
                     "core_count"):
            v = getattr(info, name, None)
            if isinstance(v, int) and v > 0:
                return v
    except Exception:
        pass
    try:
        v = getattr(jax.devices()[0], "num_cores", None)
        if isinstance(v, int) and v > 0:
            return v
    except Exception:
        pass
    return 1


def _value_net_kernel(x_ref, w1_ref, b1_ref, w2_ref, b2_ref, w3_ref, b3_ref,
                      o_ref, *, chunk):
    """One batch tile of the ValueNet forward; batch sits on the lane axis.

    x_ref  : (T, S)   activations in native (batch-major) layout
    w1_ref : (H, S)   PyTorch layout (out_features, in_features)
    b1_ref : (H, 1)
    w2_ref : (H1, H)
    b2_ref : (H1, 1)
    w3_ref : (H1, 1)  fc3 weight as a column (VPU/XLU path)
    b3_ref : (1,)     scalar bias in SMEM
    o_ref  : (1, T)   lane-dense output (batch on lanes)
    """
    w1 = w1_ref[...]
    b1 = b1_ref[...].astype(jnp.float32)
    w2 = w2_ref[...]
    b2 = b2_ref[...].astype(jnp.float32)
    w3 = w3_ref[...].astype(jnp.float32)
    b3 = b3_ref[0]

    tile = x_ref.shape[0]
    n_chunks = tile // chunk  # static (chunk divides tile by construction)

    # Statically unrolled chunk loop: per-chunk h1/h2 (~a few tens of vregs)
    # stay in registers, each chunk writes its (1, chunk) result immediately,
    # and the scheduler can overlap chunk i+1's fc1 MXU push with chunk i's
    # fc2 pop.  Nothing large is live across chunks except the tiny weights.
    for c in range(n_chunks):
        col = c * chunk  # static offset
        xc = x_ref[pl.ds(col, chunk), :].astype(w1.dtype)            # (chunk, S)

        # fc1 + ReLU: contract the trailing S axis of BOTH operands on the MXU
        # -> (H, chunk); batch stays on lanes.  f32 accumulation.
        h1 = lax.dot_general(w1, xc, (((1,), (1,)), ((), ())),
                             preferred_element_type=jnp.float32)
        h1 = jnp.maximum(h1 + b1, 0.0)

        # fc2 + ReLU (MXU, K=H).
        h2 = jnp.dot(w2, h1.astype(w2.dtype),
                     preferred_element_type=jnp.float32)
        h2 = jnp.maximum(h2 + b2, 0.0)

        # fc3 (H1 -> 1): far too small for an MXU push/pop; lane-broadcast
        # multiply (VPU) + sublane reduction (XLU).
        out = jnp.sum(h2 * w3, axis=0, keepdims=True) + b3           # (1, chunk)
        o_ref[:, pl.ds(col, chunk)] = out.astype(o_ref.dtype)


def value_net_forward(x, params, *, batch_tile=8192,
                      compute_dtype=jnp.float32, num_cores=None):
    """ValueNet forward pass.  x: (B, state_dim) -> (B, 1) float32.

    params = (w1, b1, w2, b2, w3, b3) in PyTorch layout:
        w1 (H, S), b1 (H,), w2 (H1, H), b2 (H1,), w3 (1, H1), b3 (1,)

    compute_dtype only affects the weight/matmul dtype; biases, ReLU and MXU
    accumulation stay f32.  bf16 gives ~1e-2 relative error by design, and its
    HBM-bandwidth saving only materializes when x itself arrives in bf16.
    """
    w1, b1, w2, b2, w3, b3 = params
    B, S = x.shape
    H = w1.shape[0]
    H1 = w2.shape[0]

    if num_cores is None:
        num_cores = _num_tensorcores()

    assert batch_tile % 128 == 0, "batch_tile must be a multiple of 128 (lanes)"

    # Lane-dense batch tile; the ragged last block is masked by Pallas, so no
    # wrapper-side padding or transpose copy is needed.
    tile = min(batch_tile, _round_up(B, 128))
    if num_cores > 1:
        # Balance the grid over all TensorCores (v7x): make the step count a
        # multiple of the core count when that keeps tiles >= 128 lanes.
        n_steps = pl.cdiv(B, tile)
        if n_steps % num_cores:
            n_steps = _round_up(n_steps, num_cores)
            tile = max(128, _round_up(pl.cdiv(B, n_steps), 128))
    grid = (pl.cdiv(B, tile),)

    # In-kernel lane chunking (keeps h1/h2 in vregs). tile is a multiple of 128.
    chunk = 512 if tile % 512 == 0 else 128

    w1c = w1.astype(compute_dtype)
    w2c = w2.astype(compute_dtype)
    b1c = b1.reshape(H, 1).astype(jnp.float32)
    b2c = b2.reshape(H1, 1).astype(jnp.float32)
    w3c = w3.reshape(H1, 1).astype(jnp.float32)   # column for the VPU/XLU fc3
    b3c = b3.reshape(1).astype(jnp.float32)       # SMEM scalar

    rep = lambda i: (0, 0)  # weights/biases resident across all batch tiles

    # VMEM budget: double-buffered x/out tiles + resident weights + chunk
    # slack.  Only raise the scoped limit when the default would not fit.
    wbytes = jnp.dtype(compute_dtype).itemsize
    est = 2 * tile * S * x.dtype.itemsize          # x tile, double-buffered
    est += 2 * tile * 4                            # out tile, double-buffered
    est += 2 * (H * S + H1 * H) * wbytes + 4 * (H + 2 * H1 + 1) * 4
    est += 4 * chunk * (H + H1) * 4                # in-flight chunk activations
    vmem_limit = None if est <= (32 << 20) else min(int(est * 2), 128 << 20)

    out_t = pl.pallas_call(
        functools.partial(_value_net_kernel, chunk=chunk),
        out_shape=jax.ShapeDtypeStruct((1, B), jnp.float32),
        grid=grid,
        in_specs=[
            pl.BlockSpec((tile, S), lambda i: (i, 0)),          # x, native layout
            pl.BlockSpec((H, S), rep),                          # w1
            pl.BlockSpec((H, 1), rep),                          # b1
            pl.BlockSpec((H1, H), rep),                         # w2
            pl.BlockSpec((H1, 1), rep),                         # b2
            pl.BlockSpec((H1, 1), rep),                         # w3
            pl.BlockSpec(memory_space=pltpu.MemorySpace.SMEM),  # b3 scalar
        ],
        out_specs=pl.BlockSpec((1, tile), lambda i: (0, i)),
        compiler_params=pltpu.CompilerParams(
            dimension_semantics=("parallel",),
            vmem_limit_bytes=vmem_limit),
    )(x, w1c, b1c, w2c, b2c, w3c, b3c)

    return out_t.T  # (B, 1) float32


def init_value_net_params(key, state_dim, hidden_dim, hidden_dim1):
    """Deterministic synthetic init (PyTorch-style uniform fan-in bounds),
    stored in PyTorch layout (out_features, in_features)."""
    ks = jax.random.split(key, 6)

    def lin(kw, kb, fan_in, fan_out):
        bound = 1.0 / np.sqrt(fan_in)
        w = jax.random.uniform(kw, (fan_out, fan_in), jnp.float32,
                               -bound, bound)
        b = jax.random.uniform(kb, (fan_out,), jnp.float32, -bound, bound)
        return w, b

    w1, b1 = lin(ks[0], ks[1], state_dim, hidden_dim)
    w2, b2 = lin(ks[2], ks[3], hidden_dim, hidden_dim1)
    w3, b3 = lin(ks[4], ks[5], hidden_dim1, 1)
    return (w1, b1, w2, b2, w3, b3)


def value_net_reference(x, params):
    w1, b1, w2, b2, w3, b3 = params
    h1 = jnp.maximum(x @ w1.T + b1, 0.0)
    h2 = jnp.maximum(h1 @ w2.T + b2, 0.0)
    return h2 @ w3.T + b3


if __name__ == "__main__":
    # Shapes consistent with the module: state_dim=8, hidden=32, hidden1=32.
    state_dim, hidden_dim, hidden_dim1 = 8, 32, 32

    key = jax.random.PRNGKey(0)
    k_x, k_x2, k_p = jax.random.split(key, 3)
    params = init_value_net_params(k_p, state_dim, hidden_dim, hidden_dim1)

    # Small batch: single (ragged, masked) tile.
    batch = 8
    x = jax.random.normal(k_x, (batch, state_dim), dtype=jnp.float32)
    out = jax.block_until_ready(value_net_forward(x, params))
    ref = value_net_reference(x, params)
    assert out.shape == (batch, 1), out.shape
    assert jnp.allclose(out, ref, atol=1e-4, rtol=1e-4), (
        "Pallas output mismatch vs reference (f32, small batch)")

    # Multi-step grid + ragged last block (300 = 2*128 + 44), no padding copy.
    batch2 = 300
    x2 = jax.random.normal(k_x2, (batch2, state_dim), dtype=jnp.float32)
    out2 = jax.block_until_ready(
        value_net_forward(x2, params, batch_tile=128))
    ref2 = value_net_reference(x2, params)
    assert out2.shape == (batch2, 1), out2.shape
    assert jnp.allclose(out2, ref2, atol=1e-4, rtol=1e-4), (
        "Pallas output mismatch vs reference (f32, ragged multi-step grid)")

    # bf16 x end-to-end (this is what realizes the HBM saving) with f32
    # accumulation; ~1e-2 relative error expected from bf16 rounding.
    out_bf16 = jax.block_until_ready(
        value_net_forward(x2.astype(jnp.bfloat16), params, batch_tile=128,
                          compute_dtype=jnp.bfloat16))
    assert out_bf16.shape == (batch2, 1), out_bf16.shape
    assert jnp.allclose(out_bf16, ref2, atol=1e-1, rtol=1e-1), (
        "Pallas bf16 output too far from f32 reference")

    print("KERNEL_OK")
</pallas_src>

<mosaic_0001>
module attributes {stable_mosaic.version = 11 : i64} {
  func.func @_value_net_kernel(%arg0: i32, %arg1: memref<128x8xf32, #tpu.memory_space<vmem>>, %arg2: memref<32x8xf32, #tpu.memory_space<vmem>>, %arg3: memref<32x1xf32, #tpu.memory_space<vmem>>, %arg4: memref<32x32xf32, #tpu.memory_space<vmem>>, %arg5: memref<32x1xf32, #tpu.memory_space<vmem>>, %arg6: memref<32x1xf32, #tpu.memory_space<vmem>>, %arg7: memref<1xf32, #tpu.memory_space<smem>>, %arg8: memref<1x128xf32, #tpu.memory_space<vmem>>) attributes {dimension_semantics = [#tpu.dimension_semantics<parallel>], iteration_bounds = array<i64: 1>, scalar_prefetch = 0 : i64, scratch_operands = 0 : i64, tpu.core_type = #tpu.core_type<tc>, window_params = [{transform_indices = @transform_0, window_bounds = array<i64: 128, 8>}, {pipeline_mode = #tpu.pipeline_mode<synchronous>, transform_indices = @transform_1, window_bounds = array<i64: 32, 8>}, {pipeline_mode = #tpu.pipeline_mode<synchronous>, transform_indices = @transform_2, window_bounds = array<i64: 32, 1>}, {pipeline_mode = #tpu.pipeline_mode<synchronous>, transform_indices = @transform_3, window_bounds = array<i64: 32, 32>}, {pipeline_mode = #tpu.pipeline_mode<synchronous>, transform_indices = @transform_4, window_bounds = array<i64: 32, 1>}, {pipeline_mode = #tpu.pipeline_mode<synchronous>, transform_indices = @transform_5, window_bounds = array<i64: 32, 1>}, {transform_indices = @transform_6, window_bounds = array<i64: 1>}, {transform_indices = @transform_7, window_bounds = array<i64: 1, 128>}]} {
    %c0 = arith.constant 0 : index
    %c0_0 = arith.constant 0 : index
    %0 = vector.load %arg2[%c0, %c0_0] : memref<32x8xf32, #tpu.memory_space<vmem>>, vector<32x8xf32>
    %c0_1 = arith.constant 0 : index
    %c0_2 = arith.constant 0 : index
    %1 = vector.load %arg3[%c0_1, %c0_2] : memref<32x1xf32, #tpu.memory_space<vmem>>, vector<32x1xf32>
    %c0_3 = arith.constant 0 : index
    %c0_4 = arith.constant 0 : index
    %2 = vector.load %arg4[%c0_3, %c0_4] : memref<32x32xf32, #tpu.memory_space<vmem>>, vector<32x32xf32>
    %c0_5 = arith.constant 0 : index
    %c0_6 = arith.constant 0 : index
    %3 = vector.load %arg5[%c0_5, %c0_6] : memref<32x1xf32, #tpu.memory_space<vmem>>, vector<32x1xf32>
    %c0_7 = arith.constant 0 : index
    %c0_8 = arith.constant 0 : index
    %4 = vector.load %arg6[%c0_7, %c0_8] : memref<32x1xf32, #tpu.memory_space<vmem>>, vector<32x1xf32>
    %c0_9 = arith.constant 0 : index
    %5 = memref.load %arg7[%c0_9] : memref<1xf32, #tpu.memory_space<smem>>
    %c0_10 = arith.constant 0 : index
    %c0_11 = arith.constant 0 : index
    %6 = vector.load %arg1[%c0_10, %c0_11] : memref<128x8xf32, #tpu.memory_space<vmem>>, vector<128x8xf32>
    %cst = arith.constant dense<0.000000e+00> : vector<32x128xf32>
    %7 = tpu.matmul %0, %6, %cst {dimension_numbers = #tpu.dot_dimension_numbers<[1], [1], [0], [0], [0, 0, 1, 0], [], []>} : vector<32x8xf32>, vector<128x8xf32>, vector<32x128xf32> -> vector<32x128xf32>
    %8 = vector.broadcast %1 : vector<32x1xf32> to vector<32x128xf32>
    %9 = arith.addf %7, %8 : vector<32x128xf32>
    %cst_12 = arith.constant 0.000000e+00 : f32
    %10 = vector.broadcast %cst_12 : f32 to vector<32x128xf32>
    %11 = arith.maximumf %9, %10 : vector<32x128xf32>
    %cst_13 = arith.constant dense<0.000000e+00> : vector<32x128xf32>
    %12 = tpu.matmul %2, %11, %cst_13 {dimension_numbers = #tpu.dot_dimension_numbers<[1], [0], [0], [1], [0, 0, 1, 1], [], []>} : vector<32x32xf32>, vector<32x128xf32>, vector<32x128xf32> -> vector<32x128xf32>
    %13 = vector.broadcast %3 : vector<32x1xf32> to vector<32x128xf32>
    %14 = arith.addf %12, %13 : vector<32x128xf32>
    %cst_14 = arith.constant 0.000000e+00 : f32
    %15 = vector.broadcast %cst_14 : f32 to vector<32x128xf32>
    %16 = arith.maximumf %14, %15 : vector<32x128xf32>
    %17 = vector.broadcast %4 : vector<32x1xf32> to vector<32x128xf32>
    %18 = arith.mulf %16, %17 : vector<32x128xf32>
    %cst_15 = arith.constant dense<0.000000e+00> : vector<128xf32>
    %19 = vector.multi_reduction <add>, %18, %cst_15 [0] : vector<32x128xf32> to vector<128xf32>
    %20 = vector.shape_cast %19 : vector<128xf32> to vector<1x128xf32>
    %21 = vector.broadcast %5 : f32 to vector<1x128xf32>
    %22 = arith.addf %20, %21 : vector<1x128xf32>
    %c0_16 = arith.constant 0 : index
    %c0_17 = arith.constant 0 : index
    %23 = vector.load %arg8[%c0_16, %c0_17] : memref<1x128xf32, #tpu.memory_space<vmem>>, vector<1x128xf32>
    tpu.vector_store %arg8[%c0_16, %c0_17], %22 {strides = array<i32>} : memref<1x128xf32, #tpu.memory_space<vmem>>, vector<1x128xf32>,
    return
  }
  func.func @transform_0(%arg0: i32) -> (i32, i32) {
    %c0_i32 = arith.constant 0 : i32
    %c0_i32_0 = arith.constant 0 : i32
    return %arg0, %c0_i32 : i32, i32
  }
  func.func @transform_1(%arg0: i32) -> (i32, i32) {
    %c0_i32 = arith.constant 0 : i32
    %c0_i32_0 = arith.constant 0 : i32
    %c0_i32_1 = arith.constant 0 : i32
    return %c0_i32, %c0_i32_0 : i32, i32
  }
  func.func @transform_2(%arg0: i32) -> (i32, i32) {
    %c0_i32 = arith.constant 0 : i32
    %c0_i32_0 = arith.constant 0 : i32
    %c0_i32_1 = arith.constant 0 : i32
    return %c0_i32, %c0_i32_0 : i32, i32
  }
  func.func @transform_3(%arg0: i32) -> (i32, i32) {
    %c0_i32 = arith.constant 0 : i32
    %c0_i32_0 = arith.constant 0 : i32
    %c0_i32_1 = arith.constant 0 : i32
    return %c0_i32, %c0_i32_0 : i32, i32
  }
  func.func @transform_4(%arg0: i32) -> (i32, i32) {
    %c0_i32 = arith.constant 0 : i32
    %c0_i32_0 = arith.constant 0 : i32
    %c0_i32_1 = arith.constant 0 : i32
    return %c0_i32, %c0_i32_0 : i32, i32
  }
  func.func @transform_5(%arg0: i32) -> (i32, i32) {
    %c0_i32 = arith.constant 0 : i32
    %c0_i32_0 = arith.constant 0 : i32
    %c0_i32_1 = arith.constant 0 : i32
    return %c0_i32, %c0_i32_0 : i32, i32
  }
  func.func @transform_6(%arg0: i32) -> i32 {
    %c0_i32 = arith.constant 0 : i32
    %c0_i32_0 = arith.constant 0 : i32
    return %c0_i32 : i32
  }
  func.func @transform_7(%arg0: i32) -> (i32, i32) {
    %c0_i32 = arith.constant 0 : i32
    %c0_i32_0 = arith.constant 0 : i32
    return %c0_i32, %arg0 : i32, i32
  }
}

</mosaic_0001>

<llo_original>
// kernel: tpu_custom_call.1
$region0: #{tpu_custom_call.1}
  #allocation0 [shape = 'u32[]', space=smem, size = 0x4, offset = 0x4, fixed_abs, tag = 'smem constant byte address 0x4 - core index']
  #allocation1 [shape = 'u32[144,128]{1,0:T(1,128)}', space=vmem, size = 0x12000, scoped, tag = 'internal scratch']
  #allocation2 [shape = 'f32[1]{0:T(128)S(6)}', space=smem, size = 0x200, scoped, tag = 'scoped memory for tpu_custom_call.1']
  %s0 = inlined_call_operand.vmem [shape: f32[8,8], index: 0, kind: input, shape index: {}]
  %s1 = inlined_call_operand.vmem [shape: f32[32,8], index: 1, kind: input, shape index: {}]
  %s2 = inlined_call_operand.vmem [shape: f32[32,1], index: 2, kind: input, shape index: {}]
  %s3 = inlined_call_operand.vmem [shape: f32[32,32], index: 3, kind: input, shape index: {}]
  %s4 = inlined_call_operand.vmem [shape: f32[32,1], index: 4, kind: input, shape index: {}]
  %s5 = inlined_call_operand.vmem [shape: f32[32,1], index: 5, kind: input, shape index: {}]
  %s6 = inlined_call_operand.<no memory space> [shape: f32[1], index: 6, kind: input, shape index: {}]
  %s7 = inlined_call_operand.hbm [shape: f32[1,8], index: 7, kind: output, shape index: {}]
  %s8 = sld [smem:[#allocation0]]
  $region38: #{tpu_custom_call.1} parent=0
    _
  %s10 = ssub.s32 1, %s8
  %s11 = scalar_select 0, %s10, %s8
  %12 = sst [smem:[#allocation2]] %s6
  $region1: #{tpu_custom_call.1} parent=0
    #allocation3 [shape = 'u8[512]{0}', space=vmem, size = 0x400, scoped, tag = 'output window, operand 0, single buffered']
    #allocation4 [shape = 's32[1]{0}', space=sflag, size = 0x4, scoped, tag = 'scoped memory for tpu_custom_call.1']
    %13 = vsyncpa [#allocation4], 0
    // Predicated region
    $region2: #{tpu_custom_call.1} parent=1 // pred_check
      _
    $region3: #{tpu_custom_call.1} parent=1 // pred_check_branch
      %15 = sbr.rel (0) target = $region5
    $region4: #{tpu_custom_call.1} parent=1 // pred_region
      _
    $region5: #{tpu_custom_call.1} parent=1 // pred_fallthru
      _
    // Predicated region
    $region6: #{tpu_custom_call.1} parent=1 // pred_check
      _
    $region7: #{tpu_custom_call.1} parent=1 // pred_check_branch
      %17 = sbr.rel (0) target = $region9
    $region8: #{tpu_custom_call.1} parent=1 // pred_region
      _
    $region9: #{tpu_custom_call.1} parent=1 // pred_fallthru
      _
    // Predicated region
    $region10: #{tpu_custom_call.1} parent=1 // pred_check
      _
    $region11: #{tpu_custom_call.1} parent=1 // pred_check_branch
      %19 = sbr.rel (0) target = $region13
    $region12: #{tpu_custom_call.1} parent=1 // pred_region
      _
    $region13: #{tpu_custom_call.1} parent=1 // pred_fallthru
      _
    // Predicated region
    $region14: #{tpu_custom_call.1} parent=1 // pred_check
      _
    $region15: #{tpu_custom_call.1} parent=1 // pred_check_branch
      %21 = sbr.rel (0) target = $region17
    $region16: #{tpu_custom_call.1} parent=1 // pred_region
      _
    $region17: #{tpu_custom_call.1} parent=1 // pred_fallthru
      _
    // Predicated region
    $region18: #{tpu_custom_call.1} parent=1 // pred_check
      _
    $region19: #{tpu_custom_call.1} parent=1 // pred_check_branch
      %23 = sbr.rel (0) target = $region21
    $region20: #{tpu_custom_call.1} parent=1 // pred_region
      _
    $region21: #{tpu_custom_call.1} parent=1 // pred_fallthru
      _
    // Predicated region
    $region22: #{tpu_custom_call.1} parent=1 // pred_check
      _
    $region23: #{tpu_custom_call.1} parent=1 // pred_check_branch
      %25 = sbr.rel (0) target = $region25
    $region24: #{tpu_custom_call.1} parent=1 // pred_region
      _
    $region25: #{tpu_custom_call.1} parent=1 // pred_fallthru
      _
    // Predicated region
    $region26: #{tpu_custom_call.1} parent=1 // pred_check
      _
    $region27: #{tpu_custom_call.1} parent=1 // pred_check_branch
      %27 = sbr.rel (0) target = $region29
    $region28: #{tpu_custom_call.1} parent=1 // pred_region
      _
    $region29: #{tpu_custom_call.1} parent=1 // pred_fallthru
      _
    %v28 = vld [vmem:[%s1] sm:$0xff]
    %v29 = vld [vmem:[%s1 + $0x8] sm:$0xff]
    %v30 = vld [vmem:[%s1 + $0x10] sm:$0xff]
    %v31 = vld [vmem:[%s1 + $0x18] sm:$0xff]
    %v32 = vld [vmem:[%s2] sm:$0xff]
    %v33 = vld [vmem:[%s2 + $0x8] sm:$0xff]
    %v34 = vld [vmem:[%s2 + $0x10] sm:$0xff]
    %v35 = vld [vmem:[%s2 + $0x18] sm:$0xff]
    %v36 = vld [vmem:[%s3] sm:$0xff]
    %v37 = vld [vmem:[%s3 + $0x8] sm:$0xff]
    %v38 = vld [vmem:[%s3 + $0x10] sm:$0xff]
    %v39 = vld [vmem:[%s3 + $0x18] sm:$0xff]
    %v40 = vld [vmem:[%s4] sm:$0xff]
    %v41 = vld [vmem:[%s4 + $0x8] sm:$0xff]
    %v42 = vld [vmem:[%s4 + $0x10] sm:$0xff]
    %v43 = vld [vmem:[%s4 + $0x18] sm:$0xff]
    %v44 = vld [vmem:[%s5] sm:$0xff]
    %v45 = vld [vmem:[%s5 + $0x8] sm:$0xff]
    %v46 = vld [vmem:[%s5 + $0x10] sm:$0xff]
    %v47 = vld [vmem:[%s5 + $0x18] sm:$0xff]
    %s48 = sld [smem:[#allocation2]]
    %v49 = vld [vmem:[%s0] sm:$0xff]
    %v50 = vld [vmem:[%s0 + $0x8] sm:$0xff]
    %v51 = vld [vmem:[%s0 + $0x10] sm:$0xff]
    %v52 = vld [vmem:[%s0 + $0x18] sm:$0xff]
    %v53 = vld [vmem:[%s0 + $0x20] sm:$0xff]
    %v54 = vld [vmem:[%s0 + $0x28] sm:$0xff]
    %v55 = vld [vmem:[%s0 + $0x30] sm:$0xff]
    %v56 = vld [vmem:[%s0 + $0x38] sm:$0xff]
    %v57 = vld [vmem:[%s0 + $0x40] sm:$0xff]
    %v58 = vld [vmem:[%s0 + $0x48] sm:$0xff]
    %v59 = vld [vmem:[%s0 + $0x50] sm:$0xff]
    %v60 = vld [vmem:[%s0 + $0x58] sm:$0xff]
    %v61 = vld [vmem:[%s0 + $0x60] sm:$0xff]
    %v62 = vld [vmem:[%s0 + $0x68] sm:$0xff]
    %v63 = vld [vmem:[%s0 + $0x70] sm:$0xff]
    %v64 = vld [vmem:[%s0 + $0x78] sm:$0xff]
    %66 = vset.pattern.permute.xlu0 0
    %67 = vperm.xlu0 %66, %v32
    %v68 = vpop.permute.xlu0 %67
    %71 = vset.pattern.permute.xlu0 0
    %72 = vperm.xlu0 %71, %v33
    %v73 = vpop.permute.xlu0 %72
    %76 = vset.pattern.permute.xlu0 0
    %77 = vperm.xlu0 %76, %v34
    %v78 = vpop.permute.xlu0 %77
    %81 = vset.pattern.permute.xlu0 0
    %82 = vperm.xlu0 %81, %v35
    %v83 = vpop.permute.xlu0 %82
    %vm85 = vcmask 64512
    %v87 = vsel %vm85, %v28, 0
    %v90 = vsel %vm85, %v29, 0
    %v93 = vsel %vm85, %v30, 0
    %v96 = vsel %vm85, %v31, 0
    %v99 = vsel %vm85, %v49, 0
    %v102 = vsel %vm85, %v50, 0
    %v105 = vsel %vm85, %v51, 0
    %v108 = vsel %vm85, %v52, 0
    %v111 = vsel %vm85, %v53, 0
    %v114 = vsel %vm85, %v54, 0
    %v117 = vsel %vm85, %v55, 0
    %v120 = vsel %vm85, %v56, 0
    %v123 = vsel %vm85, %v57, 0
    %v126 = vsel %vm85, %v58, 0
    %v129 = vsel %vm85, %v59, 0
    %v132 = vsel %vm85, %v60, 0
    %v135 = vsel %vm85, %v61, 0
    %v138 = vsel %vm85, %v62, 0
    %v141 = vsel %vm85, %v63, 0
    %v144 = vsel %vm85, %v64, 0
    %146 = vmatprep.subr.mxu0 0.0
    %147 = vmatpush1.xpose.msra.mxu0 %v99
    %148 = vmatprep.subr.mxu0 0.0
    %149 = vmatpush1.xpose.msra.mxu0 %v102
    %150 = vmatprep.subr.mxu0 0.0
    %151 = vmatpush1.xpose.msra.mxu0 %v105
    %152 = vmatprep.subr.mxu0 0.0
    %153 = vmatpush1.xpose.msra.mxu0 %v108
    %154 = vmatprep.subr.mxu0 0.0
    %155 = vmatpush1.xpose.msra.mxu0 %v111
    %156 = vmatprep.subr.mxu0 0.0
    %157 = vmatpush1.xpose.msra.mxu0 %v114
    %158 = vmatprep.subr.mxu0 0.0
    %159 = vmatpush1.xpose.msra.mxu0 %v117
    %160 = vmatprep.subr.mxu0 0.0
    %161 = vmatpush1.xpose.msra.mxu0 %v120
    %162 = vmatprep.subr.mxu0 0.0
    %163 = vmatpush1.xpose.msra.mxu0 %v123
    %164 = vmatprep.subr.mxu0 0.0
    %165 = vmatpush1.xpose.msra.mxu0 %v126
    %166 = vmatprep.subr.mxu0 0.0
    %167 = vmatpush1.xpose.msra.mxu0 %v129
    %168 = vmatprep.subr.mxu0 0.0
    %169 = vmatpush1.xpose.msra.mxu0 %v132
    %170 = vmatprep.subr.mxu0 0.0
    %171 = vmatpush1.xpose.msra.mxu0 %v135
    %172 = vmatprep.subr.mxu0 0.0
    %173 = vmatpush1.xpose.msra.mxu0 %v138
    %174 = vmatprep.subr.mxu0 0.0
    %175 = vmatpush1.xpose.msra.mxu0 %v141
    %176 = vmatprep.subr.mxu0 0.0
    %177 = vmatpush1.xpose.msra.mxu0 %v144
    %178 = vmatprep.subr.mxu0 0.0
    %179 = vmatpush1.xpose.msra.mxu0 0.0
    %180 = vmatprep.subr.mxu0 0.0
    %181 = vmatpush1.xpose.msra.mxu0 0.0
    %182 = vmatprep.subr.mxu0 0.0
    %183 = vmatpush1.xpose.msra.mxu0 0.0
    %184 = vmatprep.subr.mxu0 0.0
    %185 = vmatpush1.xpose.msra.mxu0 0.0
    %186 = vmatprep.subr.mxu0 0.0
    %187 = vmatpush1.xpose.msra.mxu0 0.0
    %188 = vmatprep.subr.mxu0 0.0
    %189 = vmatpush1.xpose.msra.mxu0 0.0
    %190 = vmatprep.subr.mxu0 0.0
    %191 = vmatpush1.xpose.msra.mxu0 0.0
    %192 = vmatprep.subr.mxu0 0.0
    %193 = vmatpush1.xpose.msra.mxu0 0.0
    %194 = vmatprep.subr.mxu0 0.0
    %195 = vmatpush1.xpose.msra.mxu0 0.0
    %196 = vmatprep.subr.mxu0 0.0
    %197 = vmatpush1.xpose.msra.mxu0 0.0
    %198 = vmatprep.subr.mxu0 0.0
    %199 = vmatpush1.xpose.msra.mxu0 0.0
    %200 = vmatprep.subr.mxu0 0.0
    %201 = vmatpush1.xpose.msra.mxu0 0.0
    %202 = vmatprep.subr.mxu0 0.0
    %203 = vmatpush1.xpose.msra.mxu0 0.0
    %204 = vmatprep.subr.mxu0 0.0
    %205 = vmatpush1.xpose.msra.mxu0 0.0
    %206 = vmatprep.subr.mxu0 0.0
    %207 = vmatpush1.xpose.msra.mxu0 0.0
    %208 = vmatprep.subr.mxu0 0.0
    %209 = vmatpush1.xpose.msra.mxu0 0.0
    %210 = vmatprep.mubr.f32.mxu0 0.0
    %211 = vmatmul.mubr.f32.gmra.mrb[0].mxu0 %v87
    %v212 = vpop.f32.mrb[0].mxu0
    %v213 = vadd.f32 %v68, %v212
    %v214 = vpop.f32.mrb[0].mxu0
    %215 = vmatprep.mubr.f32.mxu0 0.0
    %216 = vmatmul.mubr.f32.gmra.mrb[0].mxu0 %v90
    %v217 = vpop.f32.mrb[0].mxu0
    %v218 = vadd.f32 %v73, %v217
    %v219 = vpop.f32.mrb[0].mxu0
    %220 = vmatprep.mubr.f32.mxu0 0.0
    %221 = vmatmul.mubr.f32.gmra.mrb[0].mxu0 %v93
    %v222 = vpop.f32.mrb[0].mxu0
    %v223 = vadd.f32 %v78, %v222
    %v224 = vpop.f32.mrb[0].mxu0
    %225 = vmatprep.mubr.f32.mxu0 0.0
    %226 = vmatmul.mubr.f32.gmra.mrb[0].mxu0 %v96
    %v227 = vpop.f32.mrb[0].mxu0
    %v228 = vadd.f32 %v83, %v227
    %v229 = vpop.f32.mrb[0].mxu0
    %230 = vdwg.mxu0
    %v231 = vmax.f32 %v213, 0.0
    %v232 = vmax.f32 %v218, 0.0
    %v233 = vmax.f32 %v223, 0.0
    %v234 = vmax.f32 %v228, 0.0
    %236 = vset.pattern.permute.xlu0 0
    %237 = vperm.xlu0 %236, %v40
    %v238 = vpop.permute.xlu0 %237
    %241 = vset.pattern.permute.xlu0 0
    %242 = vperm.xlu0 %241, %v41
    %v243 = vpop.permute.xlu0 %242
    %246 = vset.pattern.permute.xlu0 0
    %247 = vperm.xlu0 %246, %v42
    %v248 = vpop.permute.xlu0 %247
    %251 = vset.pattern.permute.xlu0 0
    %252 = vperm.xlu0 %251, %v43
    %v253 = vpop.permute.xlu0 %252
    %vm255 = vcmask 261120
    %v257 = vsel %vm255, %v36, 0
    %v260 = vsel %vm255, %v37, 0
    %v263 = vsel %vm255, %v38, 0
    %v266 = vsel %vm255, %v39, 0
    %268 = vmatprep.subr.mxu0 0.0
    %269 = vmatpush1.msra.mxu0 %v231
    %270 = vmatprep.subr.mxu0 0.0
    %271 = vmatpush1.msra.mxu0 %v232
    %272 = vmatprep.subr.mxu0 0.0
    %273 = vmatpush1.msra.mxu0 %v233
    %274 = vmatprep.subr.mxu0 0.0
    %275 = vmatpush1.msra.mxu0 %v234
    %276 = vmatprep.subr.mxu0 0.0
    %277 = vmatpush1.msra.mxu0 0.0
    %278 = vmatprep.subr.mxu0 0.0
    %279 = vmatpush1.msra.mxu0 0.0
    %280 = vmatprep.subr.mxu0 0.0
    %281 = vmatpush1.msra.mxu0 0.0
    %282 = vmatprep.subr.mxu0 0.0
    %283 = vmatpush1.msra.mxu0 0.0
    %284 = vmatprep.subr.mxu0 0.0
    %285 = vmatpush1.msra.mxu0 0.0
    %286 = vmatprep.subr.mxu0 0.0
    %287 = vmatpush1.msra.mxu0 0.0
    %288 = vmatprep.subr.mxu0 0.0
    %289 = vmatpush1.msra.mxu0 0.0
    %290 = vmatprep.subr.mxu0 0.0
    %291 = vmatpush1.msra.mxu0 0.0
    %292 = vmatprep.subr.mxu0 0.0
    %293 = vmatpush1.msra.mxu0 0.0
    %294 = vmatprep.subr.mxu0 0.0
    %295 = vmatpush1.msra.mxu0 0.0
    %296 = vmatprep.subr.mxu0 0.0
    %297 = vmatpush1.msra.mxu0 0.0
    %298 = vmatprep.subr.mxu0 0.0
    %299 = vmatpush1.msra.mxu0 0.0
    %300 = vmatprep.subr.mxu0 0.0
    %301 = vmatpush1.msra.mxu0 0.0
    %302 = vmatprep.subr.mxu0 0.0
    %303 = vmatpush1.msra.mxu0 0.0
    %304 = vmatprep.subr.mxu0 0.0
    %305 = vmatpush1.msra.mxu0 0.0
    %306 = vmatprep.subr.mxu0 0.0
    %307 = vmatpush1.msra.mxu0 0.0
    %308 = vmatprep.subr.mxu0 0.0
    %309 = vmatpush1.msra.mxu0 0.0
    %310 = vmatprep.subr.mxu0 0.0
    %311 = vmatpush1.msra.mxu0 0.0
    %312 = vmatprep.subr.mxu0 0.0
    %313 = vmatpush1.msra.mxu0 0.0
    %314 = vmatprep.subr.mxu0 0.0
    %315 = vmatpush1.msra.mxu0 0.0
    %316 = vmatprep.subr.mxu0 0.0
    %317 = vmatpush1.msra.mxu0 0.0
    %318 = vmatprep.subr.mxu0 0.0
    %319 = vmatpush1.msra.mxu0 0.0
    %320 = vmatprep.subr.mxu0 0.0
    %321 = vmatpush1.msra.mxu0 0.0
    %322 = vmatprep.subr.mxu0 0.0
    %323 = vmatpush1.msra.mxu0 0.0
    %324 = vmatprep.subr.mxu0 0.0
    %325 = vmatpush1.msra.mxu0 0.0
    %326 = vmatprep.subr.mxu0 0.0
    %327 = vmatpush1.msra.mxu0 0.0
    %328 = vmatprep.subr.mxu0 0.0
    %329 = vmatpush1.msra.mxu0 0.0
    %330 = vmatprep.subr.mxu0 0.0
    %331 = vmatpush1.msra.mxu0 0.0
    %332 = vmatprep.mubr.f32.mxu0 0.0
    %333 = vmatmul.mubr.f32.gmra.mrb[0].mxu0 %v257
    %v334 = vpop.f32.mrb[0].mxu0
    %v335 = vadd.f32 %v238, %v334
    %v336 = vpop.f32.mrb[0].mxu0
    %337 = vmatprep.mubr.f32.mxu0 0.0
    %338 = vmatmul.mubr.f32.gmra.mrb[0].mxu0 %v260
    %v339 = vpop.f32.mrb[0].mxu0
    %v340 = vadd.f32 %v243, %v339
    %v341 = vpop.f32.mrb[0].mxu0
    %342 = vmatprep.mubr.f32.mxu0 0.0
    %343 = vmatmul.mubr.f32.gmra.mrb[0].mxu0 %v263
    %v344 = vpop.f32.mrb[0].mxu0
    %v345 = vadd.f32 %v248, %v344
    %v346 = vpop.f32.mrb[0].mxu0
    %347 = vmatprep.mubr.f32.mxu0 0.0
    %348 = vmatmul.mubr.f32.gmra.mrb[0].mxu0 %v266
    %v349 = vpop.f32.mrb[0].mxu0
    %v350 = vadd.f32 %v253, %v349
    %v351 = vpop.f32.mrb[0].mxu0
    %352 = vdwg.mxu0
    %v353 = vmax.f32 %v335, 0.0
    %v354 = vmax.f32 %v340, 0.0
    %v355 = vmax.f32 %v345, 0.0
    %v356 = vmax.f32 %v350, 0.0
    %358 = vset.pattern.permute.xlu0 0
    %359 = vperm.xlu0 %358, %v44
    %v360 = vpop.permute.xlu0 %359
    %363 = vset.pattern.permute.xlu0 0
    %364 = vperm.xlu0 %363, %v45
    %v365 = vpop.permute.xlu0 %364
    %368 = vset.pattern.permute.xlu0 0
    %369 = vperm.xlu0 %368, %v46
    %v370 = vpop.permute.xlu0 %369
    %373 = vset.pattern.permute.xlu0 0
    %374 = vperm.xlu0 %373, %v47
    %v375 = vpop.permute.xlu0 %374
    %v377 = vmul.f32 %v353, %v360
    %v378 = vmul.f32 %v354, %v365
    %v379 = vmul.f32 %v355, %v370
    %v380 = vmul.f32 %v356, %v375
    %v381 = vadd.f32 %v377, %v378
    %v382 = vadd.f32 %v381, %v379
    %v383 = vadd.f32 %v382, %v380
    %v384 = vrot.slane %v383, 4
    %v385 = vadd.f32 %v383, %v384
    %v386 = vrot.slane %v385, 2
    %v387 = vadd.f32 %v385, %v386
    %v388 = vrot.slane %v387, 1
    %v389 = vadd.f32 %v387, %v388
    %v390 = vstv %s48
    %v391 = vadd.f32 %v389, %v390
    %392 = vst [vmem:[#allocation3] sm:$0x1] %v391
    // Predicated region
    $region30: #{tpu_custom_call.1} parent=1 // pred_check
      _
    $region31: #{tpu_custom_call.1} parent=1 // pred_check_branch
      %394 = sbr.rel (0) target = $region33
    $region32: #{tpu_custom_call.1} parent=1 // pred_region
      %s396 = ssub.s32 16, 16
      %397 = vsyncadd [#allocation4], %s396
      %s399 = sshll.u32 [#allocation3], 4
      %s400 = int_to_ptr.vmem [resolvable:$true] %s399
      %402 = dma.vmem_to_hbm [thread:$0]  %s400, 16, %s7, [#allocation4]
    $region33: #{tpu_custom_call.1} parent=1 // pred_fallthru
      _
    // Predicated region
    $region34: #{tpu_custom_call.1} parent=1 // pred_check
      _
    $region35: #{tpu_custom_call.1} parent=1 // pred_check_branch
      %404 = sbr.rel (0) target = $region37
    $region36: #{tpu_custom_call.1} parent=1 // pred_region
      %405 = dma.done [#allocation4], 16
    $region37: #{tpu_custom_call.1} parent=1 // pred_fallthru
      _
    %406 = vsyncpa [#allocation4], 1

</llo_original>
